<compile_context>
chip_gen: v7x
topology: tpu7x:2x2x1
jax: 0.10.0
libtpu: 0.0.40
codegen_flags: <defaults>
</compile_context>

<pallas_src>
import numpy as np
import jax
import jax.numpy as jnp
from jax.experimental import pallas as pl
from jax.experimental.pallas import tpu as pltpu


_GRAY_R, _GRAY_G, _GRAY_B = 0.2989, 0.587, 0.114  # torchvision Grayscale / ITU-R 601-2


# ----------------------------------------------------------------------------
# Separable resize weight matrices (cubic kernel, antialiased on downscale,
# coordinate convention (i + 0.5)/scale - 0.5 as in resize_right).
# ----------------------------------------------------------------------------
def _cubic(x):
    x = np.abs(x)
    x2, x3 = x * x, x ** 3
    return ((1.5 * x3 - 2.5 * x2 + 1.0) * (x <= 1.0) +
            (-0.5 * x3 + 2.5 * x2 - 4.0 * x + 2.0) * ((x > 1.0) & (x <= 2.0)))


def _resize_matrix(in_size, out_size):
    # TODO(synk): resize_right's exact boundary handling (edge replication of
    # the field of view) differs slightly at borders; rows here are
    # renormalized over valid pixels instead.
    scale = out_size / in_size
    kscale = min(scale, 1.0)  # antialias on downscale
    out_coords = np.arange(out_size, dtype=np.float64)
    in_coords = (out_coords + 0.5) / scale - 0.5              # [out]
    j = np.arange(in_size, dtype=np.float64)                  # [in]
    w = _cubic((in_coords[:, None] - j[None, :]) * kscale)    # [out, in]
    w = w / np.maximum(w.sum(axis=1, keepdims=True), 1e-12)
    return w.astype(np.float32)


# ----------------------------------------------------------------------------
# Pallas kernel: grid = (channel [parallel], width chunk [arbitrary]).
#   img_ref : [1, sideY, Wc]  f32   channel c, width chunk w of the raw image
#   ry_ref  : [S, sideY]      bf16  height-resize matrix (pad folded out)
#   rxt_ref : [Wc, Spad]      bf16  width-resize^T chunk, zero-padded to Spad
#   out_ref : [1, S, Spad]    f32   resident across w (K-accumulation)
# ----------------------------------------------------------------------------
def _make_kernel(nw):
    def kernel(img_ref, ry_ref, rxt_ref, out_ref):
        # Stage 1 (dominant FLOPs): height resize; cast image to bf16 in-kernel.
        img_bf = img_ref[0].astype(jnp.bfloat16)                       # [sideY, Wc]
        tmp = jnp.dot(ry_ref[...], img_bf,
                      preferred_element_type=jnp.float32)              # [S, Wc] f32
        # Stage 2: width-resize contribution of this chunk (lane-dense N=Spad).
        contrib = jnp.dot(tmp.astype(jnp.bfloat16), rxt_ref[...],
                          preferred_element_type=jnp.float32)          # [S, Spad] f32

        if nw == 1:
            out_ref[0] = contrib
        else:
            w = pl.program_id(1)

            @pl.when(w == 0)
            def _():
                out_ref[0] = contrib

            @pl.when(w != 0)
            def _():
                out_ref[0] = out_ref[0] + contrib

    return kernel


# ----------------------------------------------------------------------------
# VMEM sizing / width-chunk selection.
# ----------------------------------------------------------------------------
def _vmem_need(sideY, wc, S, Spad, in_itemsize):
    return (2 * sideY * wc * in_itemsize      # image chunk, double buffered
            + 2 * S * sideY * 2               # ry (bf16)
            + 2 * wc * Spad * 2               # rx^T chunk (bf16)
            + 2 * S * Spad * 4                # output block, double buffered
            + sideY * wc * 2                  # in-kernel bf16 image copy
            + S * wc * (4 + 2)                # stage-1 result (f32 + bf16 copy)
            + S * Spad * 4)                   # stage-2 contribution


def _pick_width_chunk(sideX, sideY, S, Spad, in_itemsize, vmem_budget):
    # Chunk widths must be multiples of 128 that divide sideX (or sideX itself).
    cands = sorted({sideX} | {wc for wc in range(128, sideX, 128) if sideX % wc == 0},
                   reverse=True)
    fitting = [wc for wc in cands
               if _vmem_need(sideY, wc, S, Spad, in_itemsize) <= vmem_budget]
    if not fitting:
        # No chunk that fits (e.g. sideX has no multiple-of-128 divisor);
        # best effort with the smallest available chunk.
        return min(cands)
    multi = [wc for wc in fitting if sideX // wc >= 2]
    if multi:                               # prefer >=2 chunks: hides prologue DMA
        preferred = [wc for wc in multi if wc <= 512]
        return preferred[0] if preferred else multi[-1]
    return fitting[0]


# ----------------------------------------------------------------------------
# Wrapper: MakeCutoutsDango.forward with Overview=4, InnerCrop=0, skip_augs.
# ----------------------------------------------------------------------------
def make_cutouts_dango(input_nchw, cut_size, Overview=4, InnerCrop=0):
    assert Overview == 4, "kernel implements the Overview=4 path"
    # TODO(synk): InnerCrop>0 (random-sized random crops) and the random
    # torchvision augmentations (RandomHorizontalFlip/Affine/ColorJitter/noise)
    # have no deterministic Pallas equivalent; treated as skip_augs=True.
    assert InnerCrop == 0

    n, nch, sideY, sideX = (int(d) for d in input_nchw.shape)
    assert n == 1 and nch == 3
    S = int(cut_size)
    max_size = min(sideX, sideY)

    # F.pad(input, (padW, padW, padH, padH)) — zero padding, last dim first.
    padW = (sideY - max_size) // 2            # pad of the width dim
    padH = (sideX - max_size) // 2            # pad of the height dim
    Hp, Wp = sideY + 2 * padH, sideX + 2 * padW

    # Resize matrices for the PADDED image, with the zero rows/cols folded out
    # by slicing — so the kernel only ever reads the original, unpadded image.
    ry = _resize_matrix(Hp, S)[:, padH:padH + sideY]       # [S, sideY]
    rx = _resize_matrix(Wp, S)[:, padW:padW + sideX]       # [S, sideX]

    # Lane-dense output: pad stage-2 N up to a multiple of 128 with zero cols.
    Spad = ((S + 127) // 128) * 128
    rxt_pad = np.zeros((sideX, Spad), np.float32)
    rxt_pad[:, :S] = rx.T

    img = input_nchw[0]                                    # [3, sideY, sideX]
    in_itemsize = np.dtype(img.dtype).itemsize

    try:
        vmem_cap = int(pltpu.get_tpu_info().vmem_capacity_bytes)
    except Exception:
        vmem_cap = 64 << 20                                # assume v7x physical floor
    vmem_budget = max(vmem_cap - (8 << 20), 32 << 20)

    Wc = _pick_width_chunk(sideX, sideY, S, Spad, in_itemsize, vmem_budget)
    nw = sideX // Wc
    need = _vmem_need(sideY, Wc, S, Spad, in_itemsize)
    vmem_limit = int(min(max(need + (4 << 20), 16 << 20), vmem_budget))

    ry_bf = jnp.asarray(ry, dtype=jnp.bfloat16)
    rxt_bf = jnp.asarray(rxt_pad, dtype=jnp.bfloat16)

    out_pad = pl.pallas_call(
        _make_kernel(nw),
        grid=(3, nw),
        in_specs=[
            pl.BlockSpec((1, sideY, Wc), lambda c, w: (c, 0, w)),
            pl.BlockSpec((S, sideY), lambda c, w: (0, 0)),
            pl.BlockSpec((Wc, Spad), lambda c, w: (w, 0)),
        ],
        out_specs=pl.BlockSpec((1, S, Spad), lambda c, w: (c, 0, 0)),
        out_shape=jax.ShapeDtypeStruct((3, S, Spad), jnp.float32),
        compiler_params=pltpu.CompilerParams(
            dimension_semantics=("parallel", "arbitrary"),
            vmem_limit_bytes=vmem_limit,
        ),
    )(img, ry_bf, rxt_bf)

    cut = out_pad if Spad == S else out_pad[:, :, :S]      # [3, S, S] cutout
    flip = jnp.flip(cut, axis=-1)                          # hflip(cutout)
    luma = _GRAY_R * cut[0] + _GRAY_G * cut[1] + _GRAY_B * cut[2]
    gray = jnp.broadcast_to(luma[None], (3, S, S))         # Grayscale(3)(cutout)
    grayf = jnp.flip(gray, axis=-1)                        # Grayscale(3)(hflip(cutout))

    # torch.cat([cutout, gray(cutout), hflip(cutout), gray(hflip(cutout))])
    return jnp.stack([cut, gray, flip, grayf], axis=0)     # [4, 3, S, S]


if __name__ == "__main__":
    cut_size = 8
    key = jax.random.PRNGKey(0)
    k1, k2 = jax.random.split(key)

    fn = jax.jit(make_cutouts_dango, static_argnums=(1, 2, 3))

    # Case 1: square image (no implicit padding).
    x = jax.random.uniform(k1, (1, 3, 16, 16), dtype=jnp.float32)
    out = jax.block_until_ready(fn(x, cut_size))
    assert out.shape == (4, 3, cut_size, cut_size), out.shape
    assert out.dtype == jnp.float32
    o = np.asarray(out)

    # hflip / gray relations of the 4 cutouts
    np.testing.assert_allclose(o[2], o[0][:, :, ::-1], rtol=1e-5, atol=1e-5)
    np.testing.assert_allclose(o[3], o[1][:, :, ::-1], rtol=1e-5, atol=1e-5)
    luma = _GRAY_R * o[0, 0] + _GRAY_G * o[0, 1] + _GRAY_B * o[0, 2]
    np.testing.assert_allclose(o[1, 0], luma, rtol=1e-5, atol=1e-5)
    np.testing.assert_allclose(o[1, 2], luma, rtol=1e-5, atol=1e-5)

    # separable-resize reference in f32 (loose tol: kernel runs bf16 inputs)
    ry = _resize_matrix(16, cut_size)
    rx = _resize_matrix(16, cut_size)
    ref = np.einsum("sh,chw,tw->cst", ry, np.asarray(x[0], np.float32), rx)
    np.testing.assert_allclose(o[0], ref, rtol=0.05, atol=0.03)

    # Case 2: non-square image exercises the padding folded into the matrices.
    x2 = jax.random.uniform(k2, (1, 3, 24, 16), dtype=jnp.float32)
    o2 = np.asarray(jax.block_until_ready(fn(x2, cut_size)))
    assert o2.shape == (4, 3, cut_size, cut_size)
    padW2 = (24 - 16) // 2
    imgp = np.pad(np.asarray(x2[0], np.float32), ((0, 0), (0, 0), (padW2, padW2)))
    ry2 = _resize_matrix(imgp.shape[1], cut_size)
    rx2 = _resize_matrix(imgp.shape[2], cut_size)
    ref2 = np.einsum("sh,chw,tw->cst", ry2, imgp, rx2)
    np.testing.assert_allclose(o2[0], ref2, rtol=0.05, atol=0.03)
    np.testing.assert_allclose(o2[2], o2[0][:, :, ::-1], rtol=1e-5, atol=1e-5)

    print("KERNEL_OK")
</pallas_src>

<mosaic_0001>
module attributes {stable_mosaic.version = 11 : i64} {
  func.func @kernel(%arg0: i32, %arg1: i32, %arg2: memref<1x16x16xf32, #tpu.memory_space<vmem>>, %arg3: memref<8x16xbf16, #tpu.memory_space<vmem>>, %arg4: memref<16x128xbf16, #tpu.memory_space<vmem>>, %arg5: memref<1x8x128xf32, #tpu.memory_space<vmem>>) attributes {dimension_semantics = [#tpu.dimension_semantics<parallel>, #tpu.dimension_semantics<arbitrary>], iteration_bounds = array<i64: 3, 1>, scalar_prefetch = 0 : i64, scratch_operands = 0 : i64, tpu.core_type = #tpu.core_type<tc>, window_params = [{transform_indices = @transform_0, window_bounds = array<i64: 1, 16, 16>}, {pipeline_mode = #tpu.pipeline_mode<synchronous>, transform_indices = @transform_1, window_bounds = array<i64: 8, 16>}, {transform_indices = @transform_2, window_bounds = array<i64: 16, 128>}, {transform_indices = @transform_3, window_bounds = array<i64: 1, 8, 128>}]} {
    %c0 = arith.constant 0 : index
    %c0_0 = arith.constant 0 : index
    %c0_1 = arith.constant 0 : index
    %0 = vector.load %arg2[%c0, %c0_0, %c0_1] : memref<1x16x16xf32, #tpu.memory_space<vmem>>, vector<1x16x16xf32>
    %1 = vector.shape_cast %0 : vector<1x16x16xf32> to vector<16x16xf32>
    %2 = arith.truncf %1 : vector<16x16xf32> to vector<16x16xbf16>
    %c0_2 = arith.constant 0 : index
    %c0_3 = arith.constant 0 : index
    %3 = vector.load %arg3[%c0_2, %c0_3] : memref<8x16xbf16, #tpu.memory_space<vmem>>, vector<8x16xbf16>
    %cst = arith.constant dense<0.000000e+00> : vector<8x16xf32>
    %4 = tpu.matmul %3, %2, %cst {dimension_numbers = #tpu.dot_dimension_numbers<[1], [0], [0], [1], [0, 0, 1, 1], [], []>} : vector<8x16xbf16>, vector<16x16xbf16>, vector<8x16xf32> -> vector<8x16xf32>
    %5 = arith.truncf %4 : vector<8x16xf32> to vector<8x16xbf16>
    %c0_4 = arith.constant 0 : index
    %c0_5 = arith.constant 0 : index
    %6 = vector.load %arg4[%c0_4, %c0_5] : memref<16x128xbf16, #tpu.memory_space<vmem>>, vector<16x128xbf16>
    %cst_6 = arith.constant dense<0.000000e+00> : vector<8x128xf32>
    %7 = tpu.matmul %5, %6, %cst_6 {dimension_numbers = #tpu.dot_dimension_numbers<[1], [0], [0], [1], [0, 0, 1, 1], [], []>} : vector<8x16xbf16>, vector<16x128xbf16>, vector<8x128xf32> -> vector<8x128xf32>
    %c0_7 = arith.constant 0 : index
    %c0_8 = arith.constant 0 : index
    %c0_9 = arith.constant 0 : index
    %8 = vector.load %arg5[%c0_7, %c0_8, %c0_9] : memref<1x8x128xf32, #tpu.memory_space<vmem>>, vector<1x8x128xf32>
    %9 = vector.shape_cast %8 : vector<1x8x128xf32> to vector<8x128xf32>
    %10 = vector.shape_cast %7 : vector<8x128xf32> to vector<1x8x128xf32>
    tpu.vector_store %arg5[%c0_7, %c0_8, %c0_9], %10 {strides = array<i32>} : memref<1x8x128xf32, #tpu.memory_space<vmem>>, vector<1x8x128xf32>,
    return
  }
  func.func @transform_0(%arg0: i32, %arg1: i32) -> (i32, i32, i32) {
    %c0_i32 = arith.constant 0 : i32
    %c0_i32_0 = arith.constant 0 : i32
    return %arg0, %c0_i32, %arg1 : i32, i32, i32
  }
  func.func @transform_1(%arg0: i32, %arg1: i32) -> (i32, i32) {
    %c0_i32 = arith.constant 0 : i32
    %c0_i32_0 = arith.constant 0 : i32
    %c0_i32_1 = arith.constant 0 : i32
    return %c0_i32, %c0_i32_0 : i32, i32
  }
  func.func @transform_2(%arg0: i32, %arg1: i32) -> (i32, i32) {
    %c0_i32 = arith.constant 0 : i32
    %c0_i32_0 = arith.constant 0 : i32
    return %arg1, %c0_i32 : i32, i32
  }
  func.func @transform_3(%arg0: i32, %arg1: i32) -> (i32, i32, i32) {
    %c0_i32 = arith.constant 0 : i32
    %c0_i32_0 = arith.constant 0 : i32
    %c0_i32_1 = arith.constant 0 : i32
    return %arg0, %c0_i32, %c0_i32_0 : i32, i32, i32
  }
}

</mosaic_0001>

<llo_original>
// kernel: make_cutouts_dango.1
$region0: #{make_cutouts_dango.1}
  #allocation0 [shape = 'u32[]', space=smem, size = 0x4, offset = 0x4, fixed_abs, tag = 'smem constant byte address 0x4 - core index']
  #allocation1 [shape = 'u32[144,128]{1,0:T(1,128)}', space=vmem, size = 0x12000, scoped, tag = 'internal scratch']
  %s0 = inlined_call_operand.hbm [shape: f32[3,16,16], index: 0, kind: input, shape index: {}]
  %s1 = inlined_call_operand.vmem [shape: bf16[8,16], index: 1, kind: input, shape index: {}]
  %s2 = inlined_call_operand.vmem [shape: bf16[16,128], index: 2, kind: input, shape index: {}]
  %s3 = inlined_call_operand.vmem [shape: f32[3,8,128], index: 3, kind: output, shape index: {}]
  %s4 = sld [smem:[#allocation0]]
  $region49: #{make_cutouts_dango.1} parent=0
    _
  %s6 = ssub.s32 1, %s4
  %s7 = scalar_select 0, %s6, %s4
  $region1: #{make_cutouts_dango.1} parent=0
    #allocation2 [shape = 'u8[16384]{0}', space=vmem, size = 0x4000, scoped, tag = 'input window, operand 0']
    #allocation3 [shape = 's32[2]{0}', space=sflag, size = 0x8, scoped, tag = 'scoped memory for make_cutouts_dango.1']
    %8 = vsyncpa [#allocation3], 0
    %s9 = scalar_lea.sflag [#allocation3], 1
    %10 = vsyncpa %s9, 0
    loop: start=0, step=1, limit=5
    $region2: #{make_cutouts_dango.1} parent=1 // loop_pre_header
      _
    $region3: #{make_cutouts_dango.1} parent=1 // loop_header
      %s12 = sphi 0, %s16
      %p13 = scmp.ge.s32.totalorder %s12, 5
      %s19 = sphi 0, %s31
      %s20 = sphi 0, %s27
      %s21 = sphi 0, %s19
      %s22 = sphi 0, %s20
      %s23 = sphi 0, %s21
      %s24 = sphi 0, %s22
      %s36 = sphi 0, %s38
      %s39 = sphi 0, %s36
      %s40 = sphi 0, %s39
      %s56 = sphi 0, %s40
      %s60 = sphi 0, %s60
      %s62 = sphi 0, %s60
      %s63 = sphi 0, %s62
      %s77 = sphi 0, %s63
      %s83 = sphi 0, %s85
      %s86 = sphi 0, %s83
      %s87 = sphi 0, %s86
      %s103 = sphi 0, %s87
      %s109 = sphi 0, %s111
      %s112 = sphi 0, %s109
      %s113 = sphi 0, %s112
      %s129 = sphi 0, %s113
    $region4: #{make_cutouts_dango.1} parent=1 // loop_header_branch
      %15 = sbr.rel (%p13) target = $region8
    $region5: #{make_cutouts_dango.1} parent=1 // loop_body
      %s17 = ssub.s32 %s12, 1
      %s18 = ssub.s32 %s12, 2
      %s25 = sadd.s32 1, %s20
      %p26 = scmp.ge.s32.totalorder %s25, 1
      %s27 = scalar_select %p26, 0, %s25
      %s28 = sadd.s32 1, %s19
      %s29 = scalar_select %p26, %s28, %s19
      %p30 = scmp.ge.s32.totalorder %s29, 3
      %s31 = scalar_select %p30, 0, %s29
      %s32 = ssub.s32 %s19, %s31
      %s33 = ssub.s32 %s20, %s27
      %s34 = sor.u32 %s32, %s33
      %p35 = scmp.eq.s32.totalorder %s34, 0
      %s37 = sadd.s32 %s36, 1
      %s38 = scalar_select %p35, %s36, %s37
      %p41 = pneg %p35
      %p42 = scmp.eq.s32.totalorder %s12, 2
      %p43 = por %p41, %p42
      %p44 = scmp.ne.s32.totalorder %s36, %s39
      %p45 = scmp.eq.s32.totalorder %s12, 0
      %p46 = por %p44, %p45
      %p47 = scmp.ne.s32.totalorder %s36, %s39
      %p48 = scmp.eq.s32.totalorder %s17, 2
      %p49 = por %p47, %p48
      %p50 = scmp.ne.s32.totalorder %s39, %s40
      %p51 = scmp.eq.s32.totalorder %s17, 0
      %p52 = por %p50, %p51
      %p53 = scmp.ne.s32.totalorder %s39, %s40
      %p54 = scmp.eq.s32.totalorder %s18, 2
      %p55 = por %p53, %p54
      %p57 = scmp.ne.s32.totalorder %s40, %s56
      %p58 = scmp.eq.s32.totalorder %s18, 0
      %p59 = por %p57, %p58
      %s61 = sadd.s32 %s60, 1
      %p64 = scmp.eq.s32.totalorder %s12, 2
      %p65 = scmp.ne.s32.totalorder %s60, %s62
      %p66 = scmp.eq.s32.totalorder %s12, 0
      %p67 = por %p65, %p66
      %p68 = scmp.ne.s32.totalorder %s60, %s62
      %p69 = scmp.eq.s32.totalorder %s17, 2
      %p70 = por %p68, %p69
      %p71 = scmp.ne.s32.totalorder %s62, %s63
      %p72 = scmp.eq.s32.totalorder %s17, 0
      %p73 = por %p71, %p72
      %p74 = scmp.ne.s32.totalorder %s62, %s63
      %p75 = scmp.eq.s32.totalorder %s18, 2
      %p76 = por %p74, %p75
      %p78 = scmp.ne.s32.totalorder %s63, %s77
      %p79 = scmp.eq.s32.totalorder %s18, 0
      %p80 = por %p78, %p79
      %s81 = ssub.s32 %s20, %s27
      %p82 = scmp.eq.s32.totalorder %s81, 0
      %s84 = sadd.s32 %s83, 1
      %s85 = scalar_select %p82, %s83, %s84
      %p88 = pneg %p82
      %p89 = scmp.eq.s32.totalorder %s12, 2
      %p90 = por %p88, %p89
      %p91 = scmp.ne.s32.totalorder %s83, %s86
      %p92 = scmp.eq.s32.totalorder %s12, 0
      %p93 = por %p91, %p92
      %p94 = scmp.ne.s32.totalorder %s83, %s86
      %p95 = scmp.eq.s32.totalorder %s17, 2
      %p96 = por %p94, %p95
      %p97 = scmp.ne.s32.totalorder %s86, %s87
      %p98 = scmp.eq.s32.totalorder %s17, 0
      %p99 = por %p97, %p98
      %p100 = scmp.ne.s32.totalorder %s86, %s87
      %p101 = scmp.eq.s32.totalorder %s18, 2
      %p102 = por %p100, %p101
      %p104 = scmp.ne.s32.totalorder %s87, %s103
      %p105 = scmp.eq.s32.totalorder %s18, 0
      %p106 = por %p104, %p105
      %s107 = ssub.s32 %s19, %s31
      %p108 = scmp.eq.s32.totalorder %s107, 0
      %s110 = sadd.s32 %s109, 1
      %s111 = scalar_select %p108, %s109, %s110
      %p114 = pneg %p108
      %p115 = scmp.eq.s32.totalorder %s12, 2
      %p116 = por %p114, %p115
      %p117 = scmp.ne.s32.totalorder %s109, %s112
      %p118 = scmp.eq.s32.totalorder %s12, 0
      %p119 = por %p117, %p118
      %p120 = scmp.ne.s32.totalorder %s109, %s112
      %p121 = scmp.eq.s32.totalorder %s17, 2
      %p122 = por %p120, %p121
      %p123 = scmp.ne.s32.totalorder %s112, %s113
      %p124 = scmp.eq.s32.totalorder %s17, 0
      %p125 = por %p123, %p124
      %p126 = scmp.ne.s32.totalorder %s112, %s113
      %p127 = scmp.eq.s32.totalorder %s18, 2
      %p128 = por %p126, %p127
      %p130 = scmp.ne.s32.totalorder %s113, %s129
      %p131 = scmp.eq.s32.totalorder %s18, 0
      %p132 = por %p130, %p131
      %p133 = scmp.le.s32.totalorder 1, %s12
      %p134 = scmp.lt.s32.totalorder %s12, 4
      %p135 = pnand %p133, %p134
      %p136 = pneg %p135
      // Predicated region
      $region9: #{make_cutouts_dango.1} parent=5 // pred_check
        _
      $region10: #{make_cutouts_dango.1} parent=5 // pred_check_branch
        %138 = sbr.rel (%p135) target = $region12
      $region11: #{make_cutouts_dango.1} parent=5 // pred_region
        %s139 = ssub.s32 %s12, 1
        // Predicated region
        $region13: #{make_cutouts_dango.1} parent=11 // pred_check
          %p140 = pneg %p73
        $region14: #{make_cutouts_dango.1} parent=11 // pred_check_branch
          %142 = sbr.rel (%p140) target = $region16
        $region15: #{make_cutouts_dango.1} parent=11 // pred_region
          _
        $region16: #{make_cutouts_dango.1} parent=11 // pred_fallthru
          _
        // Predicated region
        $region17: #{make_cutouts_dango.1} parent=11 // pred_check
          %p143 = pneg %p99
        $region18: #{make_cutouts_dango.1} parent=11 // pred_check_branch
          %145 = sbr.rel (%p143) target = $region20
        $region19: #{make_cutouts_dango.1} parent=11 // pred_region
          %s146 = smul.u32 2, %s22
          %p147 = scmp.lt.s32.totalorder %s146, 1
          %s148 = scalar_select %p147, %s146, 1
          %s149 = smul.addr %s148, 4
          %s150 = scalar_lea.vmem %s2, %s149
          %s151 = smul.u32 2, %s22
        $region20: #{make_cutouts_dango.1} parent=11 // pred_fallthru
          _
      $region12: #{make_cutouts_dango.1} parent=5 // pred_fallthru
        _
      %p152 = scmp.lt.s32.totalorder %s12, 3
      // Predicated region
      $region21: #{make_cutouts_dango.1} parent=5 // pred_check
        %p153 = pneg %p152
      $region22: #{make_cutouts_dango.1} parent=5 // pred_check_branch
        %155 = sbr.rel (%p153) target = $region24
      $region23: #{make_cutouts_dango.1} parent=5 // pred_region
        // Predicated region
        $region25: #{make_cutouts_dango.1} parent=23 // pred_check
          %p156 = pneg %p46
        $region26: #{make_cutouts_dango.1} parent=23 // pred_check_branch
          %158 = sbr.rel (%p156) target = $region28
        $region27: #{make_cutouts_dango.1} parent=23 // pred_region
          %s159 = sand.u32 %s36, 1
          %s160 = scalar_lea.sflag [#allocation3], %s159
          %s161 = sand.u32 %s36, 1
          %s162 = smul.addr %s161, 16
          %s163 = scalar_lea.vmem [#allocation2], %s162
          %s165 = ssub.s32 256, 256
          %166 = vsyncadd %s160, %s165
          %s167 = smul.addr %s19, 2
          %s168 = sadd.s32 %s20, %s167
          %s169 = smul.addr %s168, 128
          %s170 = scalar_lea.hbm %s0, %s169
          %s171 = sshll.u32 %s163, 4
          %s172 = int_to_ptr.vmem [resolvable:$true] %s171
          %177 = dma.hbm_to_vmem [thread:$0]  %s170, 256, %s172, %s160, 128, 128, 8
        $region28: #{make_cutouts_dango.1} parent=23 // pred_fallthru
          _
      $region24: #{make_cutouts_dango.1} parent=5 // pred_fallthru
        _
      %p178 = scmp.le.s32.totalorder 1, %s12
      %p179 = scmp.lt.s32.totalorder %s12, 4
      %p180 = pnand %p178, %p179
      %p181 = pneg %p180
      // Predicated region
      $region29: #{make_cutouts_dango.1} parent=5 // pred_check
        _
      $region30: #{make_cutouts_dango.1} parent=5 // pred_check_branch
        %183 = sbr.rel (%p180) target = $region32
      $region31: #{make_cutouts_dango.1} parent=5 // pred_region
        %s184 = ssub.s32 %s12, 1
        %s185 = sand.u32 %s39, 1
        %s186 = scalar_lea.sflag [#allocation3], %s185
        %s187 = sand.u32 %s39, 1
        %s188 = smul.addr %s187, 16
        %s189 = scalar_lea.vmem [#allocation2], %s188
        // Predicated region
        $region33: #{make_cutouts_dango.1} parent=31 // pred_check
          %p190 = pneg %p52
        $region34: #{make_cutouts_dango.1} parent=31 // pred_check_branch
          %192 = sbr.rel (%p190) target = $region36
        $region35: #{make_cutouts_dango.1} parent=31 // pred_region
          %193 = dma.done %s186, 256
        $region36: #{make_cutouts_dango.1} parent=31 // pred_fallthru
          _
        %s194 = sand.u32 %s39, 1
        %s195 = scalar_lea.sflag [#allocation3], %s194
        %s196 = sand.u32 %s39, 1
        %s197 = smul.addr %s196, 16
        %s198 = scalar_lea.vmem [#allocation2], %s197
        %p199 = pneg %p52
        %p200 = pneg %p49
        %p201 = pneg %p73
        %p202 = pneg %p70
        %s203 = smul.u32 2, %s22
        %p204 = scmp.lt.s32.totalorder %s203, 1
        %s205 = scalar_select %p204, %s203, 1
        %s206 = smul.addr %s205, 4
        %s207 = scalar_lea.vmem %s2, %s206
        %p208 = pneg %p99
        %p209 = pneg %p96
        %p210 = pneg %p125
        %p211 = pneg %p122
        %p212 = scmp.lt.s32.totalorder %s21, 2
        %s213 = scalar_select %p212, %s21, 2
        %s214 = smul.addr %s213, 8
        %s215 = scalar_lea.vmem %s3, %s214
        %s216 = smul.u32 2, %s22
        %p217 = scmp.lt.s32.totalorder %s216, 1
        %s218 = scalar_select %p217, %s216, 1
        %s219 = smul.addr %s218, 4
        %s220 = scalar_lea.vmem %s2, %s219
        %s221 = smul.u32 2, %s22
        %p222 = scmp.lt.s32.totalorder %s21, 2
        %s223 = scalar_select %p222, %s21, 2
        %s224 = smul.addr %s223, 8
        %s225 = scalar_lea.vmem %s3, %s224
        %v227 = vld [vmem:[%s189] sm:$0xff]
        %v228 = vld [vmem:[%s189 + $0x8] sm:$0xff]
        %v229 = vpack.c.bf16 %v228, %v227
        %v230 = vld [vmem:[%s1] sm:$0xf]
        %vm231 = vcmask 130048
        %v233 = vsel %vm231, %v230, 0
        %235 = vmatprep.subr.bf16.mxu0 0
        %236 = vmatpush1.bf16.msra.mxu0 %v229
        %237 = vmatprep.subr.bf16.mxu0 0
        %238 = vmatpush1.bf16.msra.mxu0 0
        %239 = vmatprep.subr.bf16.mxu0 0
        %240 = vmatpush1.bf16.msra.mxu0 0
        %241 = vmatprep.subr.bf16.mxu0 0
        %242 = vmatpush1.bf16.msra.mxu0 0
        %243 = vmatprep.subr.bf16.mxu0 0
        %244 = vmatpush1.bf16.msra.mxu0 0
        %245 = vmatprep.subr.bf16.mxu0 0
        %246 = vmatpush1.bf16.msra.mxu0 0
        %247 = vmatprep.subr.bf16.mxu0 0
        %248 = vmatpush1.bf16.msra.mxu0 0
        %249 = vmatprep.subr.bf16.mxu0 0
        %250 = vmatpush1.bf16.msra.mxu0 0
        %251 = vmatprep.subr.bf16.mxu0 0
        %252 = vmatpush1.bf16.msra.mxu0 0
        %253 = vmatprep.subr.bf16.mxu0 0
        %254 = vmatpush1.bf16.msra.mxu0 0
        %255 = vmatprep.subr.bf16.mxu0 0
        %256 = vmatpush1.bf16.msra.mxu0 0
        %257 = vmatprep.subr.bf16.mxu0 0
        %258 = vmatpush1.bf16.msra.mxu0 0
        %259 = vmatprep.subr.bf16.mxu0 0
        %260 = vmatpush1.bf16.msra.mxu0 0
        %261 = vmatprep.subr.bf16.mxu0 0
        %262 = vmatpush1.bf16.msra.mxu0 0
        %263 = vmatprep.subr.bf16.mxu0 0
        %264 = vmatpush1.bf16.msra.mxu0 0
        %265 = vmatprep.subr.bf16.mxu0 0
        %266 = vmatpush1.bf16.msra.mxu0 0
        %267 = vmatprep.mubr.bf16.mxu0 0
        %268 = vmatmul.mubr.bf16.gmra.mrb[0].mxu0 %v233
        %v269 = vpop.f32.mrb[0].mxu0
        %v270 = vadd.f32 0.0, %v269
        %v271 = vpop.f32.mrb[0].mxu0
        %v272 = vpop.f32.mrb[0].mxu0
        %v273 = vpop.f32.mrb[0].mxu0
        %274 = vdwg.mxu0
        %v275 = vpack.c.bf16 %v270, %v270
        %v276 = vld [vmem:[%s220] sm:$0xf]
        %v277 = vld [vmem:[%s220 + $0x4] sm:$0xf]
        %v280 = vunpack.c.l.b16 %v276
        %v281 = vunpack.c.l.b16 %v277
        %v282 = vpack.c.b16 %v281, %v280
        %v285 = vsel %vm231, %v275, 0
        %287 = vmatprep.subr.bf16.mxu0 0
        %288 = vmatpush1.bf16.msra.mxu0 %v282
        %289 = vmatprep.subr.bf16.mxu0 0
        %290 = vmatpush1.bf16.msra.mxu0 0
        %291 = vmatprep.subr.bf16.mxu0 0
        %292 = vmatpush1.bf16.msra.mxu0 0
        %293 = vmatprep.subr.bf16.mxu0 0
        %294 = vmatpush1.bf16.msra.mxu0 0
        %295 = vmatprep.subr.bf16.mxu0 0
        %296 = vmatpush1.bf16.msra.mxu0 0
        %297 = vmatprep.subr.bf16.mxu0 0
        %298 = vmatpush1.bf16.msra.mxu0 0
        %299 = vmatprep.subr.bf16.mxu0 0
        %300 = vmatpush1.bf16.msra.mxu0 0
        %301 = vmatprep.subr.bf16.mxu0 0
        %302 = vmatpush1.bf16.msra.mxu0 0
        %303 = vmatprep.subr.bf16.mxu0 0
        %304 = vmatpush1.bf16.msra.mxu0 0
        %305 = vmatprep.subr.bf16.mxu0 0
        %306 = vmatpush1.bf16.msra.mxu0 0
        %307 = vmatprep.subr.bf16.mxu0 0
        %308 = vmatpush1.bf16.msra.mxu0 0
        %309 = vmatprep.subr.bf16.mxu0 0
        %310 = vmatpush1.bf16.msra.mxu0 0
        %311 = vmatprep.subr.bf16.mxu0 0
        %312 = vmatpush1.bf16.msra.mxu0 0
        %313 = vmatprep.subr.bf16.mxu0 0
        %314 = vmatpush1.bf16.msra.mxu0 0
        %315 = vmatprep.subr.bf16.mxu0 0
        %316 = vmatpush1.bf16.msra.mxu0 0
        %317 = vmatprep.subr.bf16.mxu0 0
        %318 = vmatpush1.bf16.msra.mxu0 0
        %319 = vmatprep.mubr.bf16.mxu0 0
        %320 = vmatmul.mubr.bf16.gmra.mrb[0].mxu0 %v285
        %v321 = vpop.f32.mrb[0].mxu0
        %v322 = vadd.f32 0.0, %v321
        %v323 = vpop.f32.mrb[0].mxu0
        %v324 = vpop.f32.mrb[0].mxu0
        %v325 = vpop.f32.mrb[0].mxu0
        %326 = vdwg.mxu0
        %327 = vst [vmem:[%s225] sm:$0xff] %v322
        %p328 = scmp.lt.s32.totalorder %s21, 2
        %s329 = scalar_select %p328, %s21, 2
        %s330 = smul.addr %s329, 8
        %s331 = scalar_lea.vmem %s3, %s330
        // Predicated region
        $region37: #{make_cutouts_dango.1} parent=31 // pred_check
          %p332 = pneg %p122
        $region38: #{make_cutouts_dango.1} parent=31 // pred_check_branch
          %334 = sbr.rel (%p332) target = $region40
        $region39: #{make_cutouts_dango.1} parent=31 // pred_region
          _
        $region40: #{make_cutouts_dango.1} parent=31 // pred_fallthru
          _
      $region32: #{make_cutouts_dango.1} parent=5 // pred_fallthru
        _
      %p335 = scmp.le.s32.totalorder 2, %s12
      // Predicated region
      $region41: #{make_cutouts_dango.1} parent=5 // pred_check
        %p336 = pneg %p335
      $region42: #{make_cutouts_dango.1} parent=5 // pred_check_branch
        %338 = sbr.rel (%p336) target = $region44
      $region43: #{make_cutouts_dango.1} parent=5 // pred_region
        %s339 = ssub.s32 %s12, 2
        // Predicated region
        $region45: #{make_cutouts_dango.1} parent=43 // pred_check
          %p340 = pneg %p128
        $region46: #{make_cutouts_dango.1} parent=43 // pred_check_branch
          %342 = sbr.rel (%p340) target = $region48
        $region47: #{make_cutouts_dango.1} parent=43 // pred_region
          %p343 = scmp.lt.s32.totalorder %s23, 2
          %s344 = scalar_select %p343, %s23, 2
          %s345 = smul.addr %s344, 8
          %s346 = scalar_lea.vmem %s3, %s345
        $region48: #{make_cutouts_dango.1} parent=43 // pred_fallthru
          _
      $region44: #{make_cutouts_dango.1} parent=5 // pred_fallthru
        _
    $region6: #{make_cutouts_dango.1} parent=1 // loop_footer
      %s16 = sadd.s32 1, %s12
    $region7: #{make_cutouts_dango.1} parent=1 // loop_footer_branch
      %11 = sbr.rel target = $region3
    $region8: #{make_cutouts_dango.1} parent=1 // loop_exit
      _
    %347 = vsyncpa [#allocation3], 1
    %s348 = scalar_lea.sflag [#allocation3], 1
    %349 = vsyncpa %s348, 1

</llo_original>
